<compile_context>
chip_gen: v6e
topology: v6e:2x2x1
jax: 0.10.0
libtpu: 0.0.40
codegen_flags: <defaults>
</compile_context>

<pallas_src>
import functools

import jax
import jax.numpy as jnp
from jax.experimental import pallas as pl
from jax.experimental.pallas import tpu as pltpu

_TN_CAP = 4096        # max rows per batch tile (keeps compile time / vreg use sane)
_MIN_STEPS = 4        # prefer >=4 grid steps: DMA/compute overlap + multi-TC sharding


def _round_up(x, m):
    return (x + m - 1) // m * m


def _vmem_limit_bytes():
    """Per-generation scoped-VMEM limit: half of physical, capped at 64 MiB.
    (v5e/v6e: 128 MiB -> 64 MiB limit; v7x: 64 MiB -> 32 MiB limit.)"""
    try:
        cap = pltpu.get_tpu_info().vmem_capacity_bytes
    except Exception:
        cap = 64 * 1024 * 1024          # conservative fallback (v7x physical)
    return int(min(cap // 2, 64 * 1024 * 1024))


def _choose_batch_tile(n, c, itemsize, vmem_limit):
    """Largest sublane-aligned batch tile such that the double-buffered logits
    block PLUS ~3 live f32 temporaries (upcast / xs / exp) fit the VMEM budget,
    while still giving the grid at least _MIN_STEPS steps."""
    if n <= 8:
        return n                                    # block == full array dims
    budget = (vmem_limit * 3) // 4                  # headroom for Mosaic scratch etc.
    bytes_per_row = 2 * c * itemsize + 3 * c * 4    # 2x input (double buffer) + f32 temps
    rows_by_vmem = max(8, (budget // bytes_per_row) // 8 * 8)
    rows_by_steps = max(8, _round_up(pl.cdiv(n, _MIN_STEPS), 8))
    return min(_TN_CAP, rows_by_vmem, rows_by_steps)


def _ce_kernel(logits_ref, tgt_ref, loss_ref):
    """Per-sample cross-entropy:  CE_i = logsumexp(x_i) - x_i[target_i]."""
    x = logits_ref[...]                                       # native dtype (bf16 stays bf16)
    # numerically-stable logsumexp over the class (lane) axis; max + subtract
    # run in the input dtype on the VPU, single upcast afterwards.
    m = jnp.max(x, axis=-1, keepdims=True)                    # (TN, 1)
    xs = (x - m).astype(jnp.float32)                          # (TN, C) shifted, f32
    sum_exp = jnp.sum(jnp.exp(xs), axis=-1, keepdims=True)    # (TN, 1)
    # gather the target logit via a one-hot mask built from a lane iota;
    # picking from the shifted tile lets the `m` terms cancel:
    #   CE = m + log(sum_exp) - x[t] = log(sum_exp) - (x[t] - m)
    cols = jax.lax.broadcasted_iota(jnp.int32, xs.shape, 1)   # (TN, C)
    onehot = cols == tgt_ref[...]                             # (TN,1) -> (TN,C)
    picked_shifted = jnp.sum(jnp.where(onehot, xs, 0.0), axis=-1, keepdims=True)
    # NOTE: an out-of-range target silently yields picked=0 (loss=logsumexp);
    # PyTorch would raise instead.
    loss_ref[...] = jnp.log(sum_exp) - picked_shifted          # (TN, 1)


def per_sample_cross_entropy(logits, target, batch_tile=None):
    """Pallas kernel: per-sample CE losses, shape (N,) float32."""
    n, c = logits.shape
    vmem_limit = _vmem_limit_bytes()
    tn = batch_tile if batch_tile is not None else _choose_batch_tile(
        n, c, jnp.dtype(logits.dtype).itemsize, vmem_limit)
    tgt2d = target.astype(jnp.int32).reshape(n, 1)

    out = pl.pallas_call(
        _ce_kernel,
        out_shape=jax.ShapeDtypeStruct((n, 1), jnp.float32),
        grid_spec=pltpu.PrefetchScalarGridSpec(
            num_scalar_prefetch=0,
            grid=(pl.cdiv(n, tn),),                         # partial last block, no pad
            in_specs=[
                pl.BlockSpec((tn, c), lambda i: (i, 0)),    # logits tile (streams HBM)
                pl.BlockSpec((tn, 1), lambda i: (i, 0)),    # target tile
            ],
            out_specs=pl.BlockSpec((tn, 1), lambda i: (i, 0)),
        ),
        compiler_params=pltpu.CompilerParams(
            dimension_semantics=("parallel",),              # rows are independent
            vmem_limit_bytes=vmem_limit,                    # per-generation limit
        ),
    )(logits, tgt2d)
    return out[:, 0]


@functools.partial(jax.jit, static_argnames=("save_rate",))
def hard_mining_loss(logits, target, save_rate=2):
    """JAX equivalent of HardMining.forward (hot path in the Pallas kernel)."""
    n = logits.shape[0]
    losses = per_sample_cross_entropy(logits, target)          # (N,)
    num_saved = min(int(save_rate * n), n)                     # slice clips to N
    if num_saved >= n:
        # With the module's default save_rate=2 every sample is "saved";
        # skip the device sort entirely (identical result).
        return jnp.sum(losses)
    # argsort(-loss)[:num_saved] then sum of those samples' CE == sum of the
    # top-`num_saved` per-sample losses (tie order does not affect the sum).
    top_vals, _ = jax.lax.top_k(losses, num_saved)
    return jnp.sum(top_vals)


def _ref_losses(logits, target):
    return -jnp.take_along_axis(
        jax.nn.log_softmax(logits.astype(jnp.float32), axis=-1),
        target[:, None], axis=-1)[:, 0]


if __name__ == "__main__":
    key = jax.random.PRNGKey(0)
    k1, k2, k3, k4, k5, k6, k7, k8 = jax.random.split(key, 8)

    # --- primary: small shape matching the module's (N, C) convention ---------
    N, C = 8, 128
    logits = jax.random.normal(k1, (N, C), dtype=jnp.float32)
    target = jax.random.randint(k2, (N,), 0, C, dtype=jnp.int32)
    out = jax.block_until_ready(hard_mining_loss(logits, target, save_rate=2))
    ref = jnp.sum(_ref_losses(logits, target))                 # num_saved == N
    assert jnp.allclose(out, ref, rtol=1e-5, atol=1e-5), (out, ref)

    # --- fractional save_rate exercises the top-k path ------------------------
    out_half = jax.block_until_ready(hard_mining_loss(logits, target, save_rate=0.5))
    ref_half = jnp.sum(jax.lax.top_k(_ref_losses(logits, target), 4)[0])
    assert jnp.allclose(out_half, ref_half, rtol=1e-5, atol=1e-5), (out_half, ref_half)

    # --- ragged batch + multi-step grid with a partial last block -------------
    N2, C2 = 20, 256
    logits2 = jax.random.normal(k3, (N2, C2), dtype=jnp.float32)
    target2 = jax.random.randint(k4, (N2,), 0, C2, dtype=jnp.int32)
    losses2 = jax.block_until_ready(
        per_sample_cross_entropy(logits2, target2, batch_tile=8))
    assert jnp.allclose(losses2, _ref_losses(logits2, target2),
                        rtol=1e-5, atol=1e-5)

    # --- auto-chosen tile, 4-step grid, partial last block, no padding --------
    N3, C3 = 600, 128
    logits3 = jax.random.normal(k5, (N3, C3), dtype=jnp.float32)
    target3 = jax.random.randint(k6, (N3,), 0, C3, dtype=jnp.int32)
    losses3 = jax.block_until_ready(per_sample_cross_entropy(logits3, target3))
    assert jnp.allclose(losses3, _ref_losses(logits3, target3),
                        rtol=1e-5, atol=1e-5)

    # --- bf16 fast path (max/subtract in bf16, upcast at exp) -----------------
    N4, C4 = 16, 128
    logits4 = jax.random.normal(k7, (N4, C4), dtype=jnp.float32).astype(jnp.bfloat16)
    target4 = jax.random.randint(k8, (N4,), 0, C4, dtype=jnp.int32)
    losses4 = jax.block_until_ready(per_sample_cross_entropy(logits4, target4))
    assert jnp.allclose(losses4, _ref_losses(logits4, target4),
                        rtol=2e-2, atol=6e-2)

    print("KERNEL_OK")
</pallas_src>

<mosaic_0001>
module attributes {stable_mosaic.version = 11 : i64} {
  func.func @_ce_kernel(%arg0: i32, %arg1: memref<8x128xf32, #tpu.memory_space<vmem>>, %arg2: memref<8x1xi32, #tpu.memory_space<vmem>>, %arg3: memref<8x1xf32, #tpu.memory_space<vmem>>) attributes {dimension_semantics = [#tpu.dimension_semantics<parallel>], iteration_bounds = array<i64: 1>, scalar_prefetch = 0 : i64, scratch_operands = 0 : i64, tpu.core_type = #tpu.core_type<tc>, window_params = [{transform_indices = @transform_0, window_bounds = array<i64: 8, 128>}, {transform_indices = @transform_1, window_bounds = array<i64: 8, 1>}, {transform_indices = @transform_2, window_bounds = array<i64: 8, 1>}]} {
    %c0 = arith.constant 0 : index
    %c0_0 = arith.constant 0 : index
    %0 = vector.load %arg1[%c0, %c0_0] : memref<8x128xf32, #tpu.memory_space<vmem>>, vector<8x128xf32>
    %cst = arith.constant dense<0xFF800000> : vector<8xf32>
    %1 = vector.multi_reduction <maximumf>, %0, %cst [1] : vector<8x128xf32> to vector<8xf32>
    %2 = vector.shape_cast %1 : vector<8xf32> to vector<8x1xf32>
    %3 = vector.broadcast %2 : vector<8x1xf32> to vector<8x128xf32>
    %4 = arith.subf %0, %3 : vector<8x128xf32>
    %5 = math.exp %4 : vector<8x128xf32>
    %cst_1 = arith.constant dense<0.000000e+00> : vector<8xf32>
    %6 = vector.multi_reduction <add>, %5, %cst_1 [1] : vector<8x128xf32> to vector<8xf32>
    %7 = vector.shape_cast %6 : vector<8xf32> to vector<8x1xf32>
    %8 = tpu.iota {dimensions = array<i32: 1>} : vector<8x128xi32>
    %c0_2 = arith.constant 0 : index
    %c0_3 = arith.constant 0 : index
    %9 = vector.load %arg2[%c0_2, %c0_3] : memref<8x1xi32, #tpu.memory_space<vmem>>, vector<8x1xi32>
    %10 = vector.broadcast %9 : vector<8x1xi32> to vector<8x128xi32>
    %11 = arith.cmpi eq, %8, %10 : vector<8x128xi32>
    %cst_4 = arith.constant 0.000000e+00 : f32
    %12 = vector.broadcast %cst_4 : f32 to vector<8x128xf32>
    %13 = arith.select %11, %4, %12 : vector<8x128xi1>, vector<8x128xf32>
    %cst_5 = arith.constant dense<0.000000e+00> : vector<8xf32>
    %14 = vector.multi_reduction <add>, %13, %cst_5 [1] : vector<8x128xf32> to vector<8xf32>
    %15 = vector.shape_cast %14 : vector<8xf32> to vector<8x1xf32>
    %16 = math.log %7 : vector<8x1xf32>
    %17 = arith.subf %16, %15 : vector<8x1xf32>
    %c0_6 = arith.constant 0 : index
    %c0_7 = arith.constant 0 : index
    %18 = vector.load %arg3[%c0_6, %c0_7] : memref<8x1xf32, #tpu.memory_space<vmem>>, vector<8x1xf32>
    tpu.vector_store %arg3[%c0_6, %c0_7], %17 {strides = array<i32>} : memref<8x1xf32, #tpu.memory_space<vmem>>, vector<8x1xf32>,
    return
  }
  func.func @transform_0(%arg0: i32) -> (i32, i32) {
    %c0_i32 = arith.constant 0 : i32
    %c0_i32_0 = arith.constant 0 : i32
    return %arg0, %c0_i32 : i32, i32
  }
  func.func @transform_1(%arg0: i32) -> (i32, i32) {
    %c0_i32 = arith.constant 0 : i32
    %c0_i32_0 = arith.constant 0 : i32
    return %arg0, %c0_i32 : i32, i32
  }
  func.func @transform_2(%arg0: i32) -> (i32, i32) {
    %c0_i32 = arith.constant 0 : i32
    %c0_i32_0 = arith.constant 0 : i32
    return %arg0, %c0_i32 : i32, i32
  }
}

</mosaic_0001>

<llo_original>
// kernel: hard_mining_loss.1
$region0: #{hard_mining_loss.1}
  #allocation0 [shape = 'u32[]', space=smem, size = 0x4, offset = 0x4, fixed_abs, tag = 'smem constant byte address 0x4 - core index']
  #allocation1 [shape = 'u32[144,128]{1,0:T(1,128)}', space=vmem, size = 0x12000, scoped, tag = 'internal scratch']
  %s0 = inlined_call_operand.vmem [shape: f32[8,128], index: 0, kind: input, shape index: {}]
  %s1 = inlined_call_operand.vmem [shape: s32[8,1], index: 1, kind: input, shape index: {}]
  %s2 = inlined_call_operand.vmem [shape: f32[8,1], index: 2, kind: output, shape index: {}]
  %s3 = sld [smem:[#allocation0]]
  $region18: #{hard_mining_loss.1} parent=0
    _
  %s5 = ssub.s32 1, %s3
  %s6 = scalar_select 0, %s5, %s3
  // Predicated region
  $region2: #{hard_mining_loss.1} parent=0 // pred_check
    _
  $region3: #{hard_mining_loss.1} parent=0 // pred_check_branch
    %8 = sbr.rel (0) target = $region5
  $region4: #{hard_mining_loss.1} parent=0 // pred_region
    _
  $region5: #{hard_mining_loss.1} parent=0 // pred_fallthru
    _
  // Predicated region
  $region6: #{hard_mining_loss.1} parent=0 // pred_check
    _
  $region7: #{hard_mining_loss.1} parent=0 // pred_check_branch
    %10 = sbr.rel (0) target = $region9
  $region8: #{hard_mining_loss.1} parent=0 // pred_region
    _
  $region9: #{hard_mining_loss.1} parent=0 // pred_fallthru
    _
  %v11 = vld [vmem:[%s0] sm:$0xff]
  %12 = vmax.xlane.f32.xlu0 %v11
  %v13 = vpop.xlane.xlu0 %12
  %v14 = vsub.f32 %v11, %v13
  %v15 = vmul.f32 %v14, 1.442695
  %v16 = vpow.pop %v15
  %17 = vadd.xlane.f32.xlu0 %v16
  %v18 = vpop.xlane.xlu0 %17
  %v19 = vlaneseq
  %v20 = vand.u32 %v19, 127
  %v21 = vld [vmem:[%s1] sm:$0xff]
  %22 = vset.pattern.permute.xlu0 0
  %23 = vperm.xlu0 %22, %v21
  %v24 = vpop.permute.xlu0 %23
  %vm25 = vcmp.eq.s32.totalorder %v20, %v24
  %v26 = vsel %vm25, %v14, 0.0
  %27 = vadd.xlane.f32.xlu0 %v26
  %v28 = vpop.xlane.xlu0 %27
  %v29 = vlog2.pop %v18
  %v30 = vmul.f32 %v29, 0.6931472
  %v31 = vsub.f32 %v30, %v28
  %vm32 = vcmask 7168
  %33 = vst.msk [vmem:[%s2] sm:$0xff] %vm32, %v31
  // Predicated region
  $region10: #{hard_mining_loss.1} parent=0 // pred_check
    _
  $region11: #{hard_mining_loss.1} parent=0 // pred_check_branch
    %35 = sbr.rel (0) target = $region13
  $region12: #{hard_mining_loss.1} parent=0 // pred_region
    _
  $region13: #{hard_mining_loss.1} parent=0 // pred_fallthru
    _
  // Predicated region
  $region14: #{hard_mining_loss.1} parent=0 // pred_check
    _
  $region15: #{hard_mining_loss.1} parent=0 // pred_check_branch
    %37 = sbr.rel (0) target = $region17
  $region16: #{hard_mining_loss.1} parent=0 // pred_region
    _
  $region17: #{hard_mining_loss.1} parent=0 // pred_fallthru
    _

</llo_original>
